<compile_context>
chip_gen: v6e
topology: v6e:2x2x1
jax: 0.10.0
libtpu: 0.0.40
codegen_flags: <defaults>
</compile_context>

<pallas_src>
import functools

import jax
import jax.numpy as jnp
from jax.experimental import pallas as pl
from jax.experimental.pallas import tpu as pltpu

_SMALL_ELEMS = 1 << 16            # below this, fused XLA beats a Pallas launch
_TARGET_BLOCK_BYTES = 4 << 20     # ~4 MiB per array per block
_VMEM_LIMIT_BYTES = 48 << 20      # 3 arrays x 2 buffers x 4 MiB = 24 MiB << limit
_LANE_CANDIDATES = (4096, 2048, 1024, 512, 256, 128)


def _msa_kernel(mask_ref, x1_ref, x2_ref, o_ref):
    # mask_ref: SMEM scalar-prefetch ref (shape (1,), f32); the wrapper already
    # applied sigmoid(alpha1) and the 0.12 threshold.
    m = mask_ref[0]
    a = x1_ref[...].astype(jnp.float32)
    b = x2_ref[...].astype(jnp.float32)
    # Memory-bound blend; VALU op count is irrelevant here, keep the form that is
    # bit-identical to the reference (mask*x1 + (1-mask)*x2).
    o_ref[...] = (m * a + (1.0 - m) * b).astype(o_ref.dtype)


def _pick_lanes(n):
    for lanes in _LANE_CANDIDATES:
        if n % lanes == 0:
            return lanes
    return None


def _pick_block_rows(rows, lanes, itemsize, max_block_rows):
    br = max(1, _TARGET_BLOCK_BYTES // (lanes * itemsize))
    if max_block_rows is not None:
        br = min(br, max_block_rows)
    if br >= rows or rows <= 8:
        return rows                      # single full-array block (any row count OK)
    return max(8, (br // 8) * 8)         # tiled: row block must be a multiple of 8


@functools.partial(jax.jit, static_argnames=("use_pallas", "max_block_rows"))
def multi_scale_attention(x1, x2, alpha1, alpha2, use_pallas=None,
                          max_block_rows=None):
    """JAX/Pallas equivalent of MultiScaleAttention(ops=2).forward((x1, x2))."""
    assert x1.shape == x2.shape and x1.dtype == x2.dtype

    sig1 = jax.nn.sigmoid(alpha1.astype(jnp.float32)).reshape(1, 1)
    sig2 = jax.nn.sigmoid(alpha2.astype(jnp.float32)).reshape(1, 1)
    s = sig1[0, 0]
    mask = jnp.where(s < 0.12, jnp.float32(0.0), s)   # matches PyTorch `< 0.12 -> 0`

    n = x1.size
    lanes = _pick_lanes(n)

    if use_pallas is None:
        use_pallas = (n >= _SMALL_ELEMS) and (lanes is not None)
    if use_pallas and lanes is None:
        # TODO(synk): sizes not divisible by 128 would need a padded/masked 1-D
        # layout; fall back to fused XLA instead of adding HBM copies.
        use_pallas = False

    if not use_pallas:
        x_out = (mask * x1.astype(jnp.float32)
                 + (1.0 - mask) * x2.astype(jnp.float32)).astype(x1.dtype)
        return x_out, (sig1, sig2)

    rows = n // lanes
    v1 = x1.reshape(rows, lanes)          # free reshape (contiguous)
    v2 = x2.reshape(rows, lanes)

    itemsize = jnp.dtype(x1.dtype).itemsize
    block_rows = _pick_block_rows(rows, lanes, itemsize, max_block_rows)
    grid = (pl.cdiv(rows, block_rows),)   # last block masked if partial

    blk = pl.BlockSpec((block_rows, lanes), lambda i, m_ref: (i, 0))

    out2d = pl.pallas_call(
        _msa_kernel,
        out_shape=jax.ShapeDtypeStruct((rows, lanes), x1.dtype),
        grid_spec=pltpu.PrefetchScalarGridSpec(
            num_scalar_prefetch=1,
            grid=grid,
            in_specs=[blk, blk],
            out_specs=blk,
        ),
        compiler_params=pltpu.CompilerParams(
            dimension_semantics=("parallel",),
            vmem_limit_bytes=_VMEM_LIMIT_BYTES),
    )(mask.reshape(1), v1, v2)

    x_out = out2d.reshape(x1.shape)       # free reshape back to NCHW
    return x_out, (sig1, sig2)


def _reference(x1, x2, alpha1):
    s1 = jax.nn.sigmoid(alpha1.astype(jnp.float32))[0, 0]
    mask = jnp.where(s1 < 0.12, jnp.float32(0.0), s1)
    return (mask * x1.astype(jnp.float32)
            + (1.0 - mask) * x2.astype(jnp.float32)).astype(x1.dtype)


if __name__ == "__main__":
    key = jax.random.PRNGKey(0)
    k1, k2, k3, k4, k5, k6, ka1, ka2 = jax.random.split(key, 8)

    # Deterministic "xavier_normal_" init for (1,1) params: std = sqrt(2/(1+1)) = 1.
    alpha1 = jax.random.normal(ka1, (1, 1), dtype=jnp.float32)
    alpha2 = jax.random.normal(ka2, (1, 1), dtype=jnp.float32)

    # Small NCHW feature maps.
    x1 = jax.random.normal(k1, (2, 4, 16, 16), dtype=jnp.float32)
    x2 = jax.random.normal(k2, (2, 4, 16, 16), dtype=jnp.float32)

    # 1) Force the Pallas path on the small input (single full-array block).
    x_out, (s1, s2) = multi_scale_attention(x1, x2, alpha1, alpha2, use_pallas=True)
    jax.block_until_ready(x_out)
    jax.block_until_ready(s1)
    jax.block_until_ready(s2)
    ref = _reference(x1, x2, alpha1)
    assert x_out.dtype == x1.dtype
    assert jnp.allclose(x_out, ref, atol=1e-6, rtol=1e-6), "mismatch vs reference"
    assert jnp.allclose(s1, jax.nn.sigmoid(alpha1), atol=1e-6)
    assert jnp.allclose(s2, jax.nn.sigmoid(alpha2), atol=1e-6)

    # 2) Multi-block grid with a masked partial last block (rows=15, block=8 rows).
    y1 = jax.random.normal(k3, (1, 3, 40, 128), dtype=jnp.float32)
    y2 = jax.random.normal(k4, (1, 3, 40, 128), dtype=jnp.float32)
    y_out, _ = multi_scale_attention(y1, y2, alpha1, alpha2,
                                     use_pallas=True, max_block_rows=8)
    jax.block_until_ready(y_out)
    assert jnp.allclose(y_out, _reference(y1, y2, alpha1), atol=1e-6, rtol=1e-6)

    # 3) bf16 inputs (kernel upcasts to f32 for the blend, casts back on store).
    b1 = jax.random.normal(k5, (2, 8, 32, 128), dtype=jnp.bfloat16)
    b2 = jax.random.normal(k6, (2, 8, 32, 128), dtype=jnp.bfloat16)
    b_out, _ = multi_scale_attention(b1, b2, alpha1, alpha2, use_pallas=True)
    jax.block_until_ready(b_out)
    assert b_out.dtype == jnp.bfloat16
    assert jnp.allclose(b_out.astype(jnp.float32),
                        _reference(b1, b2, alpha1).astype(jnp.float32),
                        atol=1e-2, rtol=1e-2)

    # 4) Auto path: small tensor -> fused XLA elementwise (no Pallas launch).
    z_out, _ = multi_scale_attention(x1, x2, alpha1, alpha2)
    jax.block_until_ready(z_out)
    assert jnp.allclose(z_out, ref, atol=1e-6, rtol=1e-6)

    print("KERNEL_OK")
</pallas_src>

<mosaic_0001>
module attributes {stable_mosaic.version = 11 : i64} {
  func.func @_msa_kernel(%arg0: i32, %arg1: memref<1xf32, #tpu.memory_space<smem>>, %arg2: memref<1x2048xf32, #tpu.memory_space<vmem>>, %arg3: memref<1x2048xf32, #tpu.memory_space<vmem>>, %arg4: memref<1x2048xf32, #tpu.memory_space<vmem>>) attributes {dimension_semantics = [#tpu.dimension_semantics<parallel>], iteration_bounds = array<i64: 1>, scalar_prefetch = 1 : i64, scratch_operands = 0 : i64, tpu.core_type = #tpu.core_type<tc>, window_params = [{transform_indices = @transform_0, window_bounds = array<i64: 1, 2048>}, {transform_indices = @transform_1, window_bounds = array<i64: 1, 2048>}, {transform_indices = @transform_2, window_bounds = array<i64: 1, 2048>}]} {
    %c0 = arith.constant 0 : index
    %0 = memref.load %arg1[%c0] : memref<1xf32, #tpu.memory_space<smem>>
    %c0_0 = arith.constant 0 : index
    %c0_1 = arith.constant 0 : index
    %1 = vector.load %arg2[%c0_0, %c0_1] : memref<1x2048xf32, #tpu.memory_space<vmem>>, vector<1x2048xf32>
    %c0_2 = arith.constant 0 : index
    %c0_3 = arith.constant 0 : index
    %2 = vector.load %arg3[%c0_2, %c0_3] : memref<1x2048xf32, #tpu.memory_space<vmem>>, vector<1x2048xf32>
    %3 = vector.broadcast %0 : f32 to vector<1x2048xf32>
    %4 = arith.mulf %3, %1 : vector<1x2048xf32>
    %cst = arith.constant 1.000000e+00 : f32
    %5 = arith.subf %cst, %0 : f32
    %6 = vector.broadcast %5 : f32 to vector<1x2048xf32>
    %7 = arith.mulf %6, %2 : vector<1x2048xf32>
    %8 = arith.addf %4, %7 : vector<1x2048xf32>
    %c0_4 = arith.constant 0 : index
    %c0_5 = arith.constant 0 : index
    %9 = vector.load %arg4[%c0_4, %c0_5] : memref<1x2048xf32, #tpu.memory_space<vmem>>, vector<1x2048xf32>
    tpu.vector_store %arg4[%c0_4, %c0_5], %8 {strides = array<i32>} : memref<1x2048xf32, #tpu.memory_space<vmem>>, vector<1x2048xf32>,
    return
  }
  func.func @transform_0(%arg0: i32, %arg1: memref<1xf32, #tpu.memory_space<smem>>) -> (i32, i32) {
    %c0_i32 = arith.constant 0 : i32
    %c0_i32_0 = arith.constant 0 : i32
    return %arg0, %c0_i32 : i32, i32
  }
  func.func @transform_1(%arg0: i32, %arg1: memref<1xf32, #tpu.memory_space<smem>>) -> (i32, i32) {
    %c0_i32 = arith.constant 0 : i32
    %c0_i32_0 = arith.constant 0 : i32
    return %arg0, %c0_i32 : i32, i32
  }
  func.func @transform_2(%arg0: i32, %arg1: memref<1xf32, #tpu.memory_space<smem>>) -> (i32, i32) {
    %c0_i32 = arith.constant 0 : i32
    %c0_i32_0 = arith.constant 0 : i32
    return %arg0, %c0_i32 : i32, i32
  }
}

</mosaic_0001>

<llo_original>
// kernel: multi_scale_attention.1
$region0: #{multi_scale_attention.1}
  #allocation0 [shape = 'u32[]', space=smem, size = 0x4, offset = 0x4, fixed_abs, tag = 'smem constant byte address 0x4 - core index']
  #allocation1 [shape = 'u32[144,128]{1,0:T(1,128)}', space=vmem, size = 0x12000, scoped, tag = 'internal scratch']
  #allocation2 [shape = 's32[1]{0}', space=sflag, size = 0x4, scoped, tag = 'scoped memory for multi_scale_attention.1']
  #allocation3 [shape = 'f32[1]{0:T(128)S(6)}', space=smem, size = 0x200, scoped, tag = 'prefetched SMEM operand 0']
  %s0 = inlined_call_operand.<no memory space> [shape: f32[1], index: 0, kind: input, shape index: {}]
  %s1 = inlined_call_operand.vmem [shape: f32[1,2048], index: 1, kind: input, shape index: {}]
  %s2 = inlined_call_operand.vmem [shape: f32[1,2048], index: 2, kind: input, shape index: {}]
  %s3 = inlined_call_operand.vmem [shape: f32[1,2048], index: 3, kind: output, shape index: {}]
  %s4 = sld [smem:[#allocation0]]
  $region18: #{multi_scale_attention.1} parent=0
    _
  %s6 = ssub.s32 1, %s4
  %s7 = scalar_select 0, %s6, %s4
  %8 = sst [smem:[#allocation3]] %s0
  // Predicated region
  $region2: #{multi_scale_attention.1} parent=0 // pred_check
    _
  $region3: #{multi_scale_attention.1} parent=0 // pred_check_branch
    %10 = sbr.rel (0) target = $region5
  $region4: #{multi_scale_attention.1} parent=0 // pred_region
    _
  $region5: #{multi_scale_attention.1} parent=0 // pred_fallthru
    _
  // Predicated region
  $region6: #{multi_scale_attention.1} parent=0 // pred_check
    _
  $region7: #{multi_scale_attention.1} parent=0 // pred_check_branch
    %12 = sbr.rel (0) target = $region9
  $region8: #{multi_scale_attention.1} parent=0 // pred_region
    _
  $region9: #{multi_scale_attention.1} parent=0 // pred_fallthru
    _
  %s13 = sld [smem:[#allocation3]]
  %v14 = vld [vmem:[%s1] sm:$0xff]
  %v15 = vld [vmem:[%s1 + $0x8] sm:$0xff]
  %v16 = vld [vmem:[%s2] sm:$0xff]
  %v17 = vld [vmem:[%s2 + $0x8] sm:$0xff]
  %v18 = vstv %s13
  %v19 = vmul.f32 %v18, %v14
  %v20 = vmul.f32 %v18, %v15
  %s21 = ssub.f32 1.0, %s13
  %v22 = vstv %s21
  %v23 = vmul.f32 %v22, %v16
  %v24 = vmul.f32 %v22, %v17
  %v25 = vadd.f32 %v19, %v23
  %v26 = vadd.f32 %v20, %v24
  %27 = vst [vmem:[%s3] sm:$0xff] %v25
  %28 = vst [vmem:[%s3 + $0x8] sm:$0xff] %v26
  // Predicated region
  $region10: #{multi_scale_attention.1} parent=0 // pred_check
    _
  $region11: #{multi_scale_attention.1} parent=0 // pred_check_branch
    %30 = sbr.rel (0) target = $region13
  $region12: #{multi_scale_attention.1} parent=0 // pred_region
    _
  $region13: #{multi_scale_attention.1} parent=0 // pred_fallthru
    _
  // Predicated region
  $region14: #{multi_scale_attention.1} parent=0 // pred_check
    _
  $region15: #{multi_scale_attention.1} parent=0 // pred_check_branch
    %32 = sbr.rel (0) target = $region17
  $region16: #{multi_scale_attention.1} parent=0 // pred_region
    _
  $region17: #{multi_scale_attention.1} parent=0 // pred_fallthru
    _

</llo_original>
